<compile_context>
chip_gen: v7x
topology: tpu7x:2x2x1
jax: 0.10.0
libtpu: 0.0.40
codegen_flags: <defaults>
</compile_context>

<pallas_src>
import functools

import jax
import jax.numpy as jnp
from jax.experimental import pallas as pl
from jax.experimental.pallas import tpu as pltpu


def _round_up(n: int, m: int) -> int:
    return (n + m - 1) // m * m


def _cdiv(a: int, b: int) -> int:
    return (a + b - 1) // b


# ----------------------------------------------------------------------------
# Kernel
# ----------------------------------------------------------------------------
def _make_kernel(n_layers: int, state_size: int):
    """Fused n_layers-layer MLP: ReLU on layers 1..n-1, linear output head."""

    def kernel(x_ref, w_ref, b_ref, out_ref):
        # x_ref  : (TB, state_size) f32   raw (un-padded-lane) state tile
        # w_ref  : (L, 128, 128)    bf16  packed, VMEM-resident weights
        # b_ref  : (8, 128)         f32   packed, VMEM-resident biases
        # out_ref: (TB, 128)        bf16  lane-dense output slab
        x = x_ref[...].astype(jnp.bfloat16)

        # Layer 1: K = state_size matmul against a free static ref slice.
        acc = jnp.dot(x, w_ref[0, :state_size, :],
                      preferred_element_type=jnp.float32)
        acc = acc + b_ref[0:1, :]
        h = jnp.maximum(acc, 0.0).astype(jnp.bfloat16)

        # Hidden layers 2..n-1 (128x128 matmuls, f32 accumulate, f32 bias+ReLU).
        for l in range(1, n_layers - 1):
            acc = jnp.dot(h, w_ref[l], preferred_element_type=jnp.float32)
            acc = acc + b_ref[l:l + 1, :]
            h = jnp.maximum(acc, 0.0).astype(jnp.bfloat16)

        # Linear output head; store bf16 to halve the output HBM stream.
        y = jnp.dot(h, w_ref[n_layers - 1], preferred_element_type=jnp.float32)
        out_ref[...] = (y + b_ref[n_layers - 1:n_layers, :]).astype(out_ref.dtype)

    return kernel


# ----------------------------------------------------------------------------
# Parameters
# ----------------------------------------------------------------------------
def init_params(key, state_size, action_size, n_neurons):
    """Deterministic init of the 5 Linear layers, W stored as (in, out) f32."""
    dims = [state_size] + list(n_neurons) + [action_size]
    params = []
    for i in range(len(dims) - 1):
        key, kw, kb = jax.random.split(key, 3)
        fan_in, fan_out = dims[i], dims[i + 1]
        bound = 1.0 / jnp.sqrt(fan_in)              # matches nn.Linear default init
        w = jax.random.uniform(kw, (fan_in, fan_out), jnp.float32, -bound, bound)
        b = jax.random.uniform(kb, (fan_out,), jnp.float32, -bound, bound)
        params.append((w, b))
    return params


def pack_params(params, lane: int = 128):
    """Zero-pad every feature dim to `lane` and pack weights/biases into single
    VMEM-friendly operands (weights bf16, biases f32).  Zero padding is exact:
    padded weight rows/cols and biases are 0, so padded lanes stay 0 through ReLU."""
    n_layers = len(params)
    d_pad = _round_up(max(max(w.shape) for (w, _) in params), lane)

    w_packed = jnp.zeros((n_layers, d_pad, d_pad), jnp.bfloat16)
    b_packed = jnp.zeros((_round_up(n_layers, 8), d_pad), jnp.float32)
    for l, (w, b) in enumerate(params):
        fi, fo = w.shape
        w_packed = w_packed.at[l, :fi, :fo].set(w.astype(jnp.bfloat16))
        b_packed = b_packed.at[l, :fo].set(b)
    return w_packed, b_packed


# ----------------------------------------------------------------------------
# Forward pass
# ----------------------------------------------------------------------------
def _xla_forward(state, w_packed, b_packed, action_size):
    """Tiny-batch fast path: same precision chain, plain XLA (no kernel launch)."""
    n_layers = w_packed.shape[0]
    state_size = state.shape[1]
    h = state.astype(jnp.bfloat16)
    acc = jnp.dot(h, w_packed[0, :state_size, :],
                  preferred_element_type=jnp.float32) + b_packed[0]
    h = jnp.maximum(acc, 0.0).astype(jnp.bfloat16)
    for l in range(1, n_layers - 1):
        acc = jnp.dot(h, w_packed[l], preferred_element_type=jnp.float32) + b_packed[l]
        h = jnp.maximum(acc, 0.0).astype(jnp.bfloat16)
    y = jnp.dot(h, w_packed[n_layers - 1],
                preferred_element_type=jnp.float32) + b_packed[n_layers - 1]
    return y[:, :action_size]


@functools.partial(jax.jit,
                   static_argnames=("action_size", "tb_max", "force_pallas"))
def qnetwork_forward(state, w_packed, b_packed, action_size,
                     tb_max: int = 2048, force_pallas: bool = False):
    """Forward pass.  state: (B, state_size) f32 -> (B, action_size) f32."""
    batch, state_size = state.shape
    n_layers, d_pad, _ = w_packed.shape

    # Tiny-batch fast path: pallas_call prologue/epilogue would dominate.
    if batch <= 64 and not force_pallas:
        return _xla_forward(state, w_packed, b_packed, action_size)

    # Balanced batch tile: multiple of 16 (bf16 sublane packing), sized so the
    # ~0.35us grid-step overhead amortizes and trailing-tile waste is minimal.
    num_tiles = _cdiv(batch, tb_max)
    tb = _round_up(_cdiv(batch, num_tiles), 16)
    b_pad = tb * num_tiles

    # Only pad batch rows (cheap: state_size lanes), never the lane dim.
    x = state
    if b_pad != batch:
        x = jnp.pad(state, ((0, b_pad - batch), (0, 0)))

    out = pl.pallas_call(
        _make_kernel(n_layers, state_size),
        out_shape=jax.ShapeDtypeStruct((b_pad, d_pad), jnp.bfloat16),
        grid_spec=pltpu.PrefetchScalarGridSpec(
            num_scalar_prefetch=0,
            grid=(num_tiles,),
            in_specs=[
                # Raw state tile (last dim == full array dim -> no 128-lane rule).
                pl.BlockSpec((tb, state_size), lambda i: (i, 0)),
                # Packed weights: constant index_map -> VMEM-resident across steps.
                pl.BlockSpec((n_layers, d_pad, d_pad), lambda i: (0, 0, 0)),
                # Packed biases: constant index_map -> VMEM-resident across steps.
                pl.BlockSpec(b_packed.shape, lambda i: (0, 0)),
            ],
            out_specs=pl.BlockSpec((tb, d_pad), lambda i: (i, 0)),
        ),
        compiler_params=pltpu.CompilerParams(
            dimension_semantics=("parallel",),   # batch split across v7x's 2 TCs
        ),
    )(x, w_packed, b_packed)

    # Strip batch + lane padding; hand back f32 for downstream loss/target math.
    return out[:batch, :action_size].astype(jnp.float32)


def reference_forward(state, params):
    """Plain-JAX reference with the same precision chain as the kernel
    (bf16 weights/activations, f32 accumulation, f32 bias + ReLU)."""
    h = state.astype(jnp.bfloat16)
    for (w, b) in params[:-1]:
        acc = jnp.dot(h, w.astype(jnp.bfloat16),
                      preferred_element_type=jnp.float32) + b
        h = jnp.maximum(acc, 0.0).astype(jnp.bfloat16)
    w5, b5 = params[-1]
    return jnp.dot(h, w5.astype(jnp.bfloat16),
                   preferred_element_type=jnp.float32) + b5


if __name__ == "__main__":
    # Shapes consistent with the module: state_size=16, 4 hidden layers, 4 actions.
    state_size = 16
    action_size = 4
    n_neurons = [32, 64, 64, 32]

    key = jax.random.PRNGKey(0)
    key, k_small, k_big = jax.random.split(key, 3)
    params = init_params(key, state_size, action_size, n_neurons)
    w_packed, b_packed = pack_params(params)

    # 1) Tiny batch, forced through the Pallas kernel (exercises the kernel path).
    state_small = jax.random.normal(k_small, (2, state_size), jnp.float32)
    out_small = qnetwork_forward(state_small, w_packed, b_packed, action_size,
                                 force_pallas=True)
    out_small = jax.block_until_ready(out_small)
    ref_small = reference_forward(state_small, params)
    assert out_small.shape == (2, action_size)
    assert jnp.allclose(out_small, ref_small, atol=2e-2, rtol=2e-2), \
        "small-batch kernel mismatch vs reference"

    # 2) Larger ragged batch: multi-step grid + balanced trailing-tile padding.
    batch_big = 300
    state_big = jax.random.normal(k_big, (batch_big, state_size), jnp.float32)
    out_big = jax.block_until_ready(
        qnetwork_forward(state_big, w_packed, b_packed, action_size, tb_max=128))
    ref_big = reference_forward(state_big, params)
    assert out_big.shape == (batch_big, action_size)
    assert jnp.allclose(out_big, ref_big, atol=2e-2, rtol=2e-2), \
        "large-batch kernel mismatch vs reference"

    # 3) Default dispatch for the tiny batch -> XLA fast path, same semantics.
    out_fast = jax.block_until_ready(
        qnetwork_forward(state_small, w_packed, b_packed, action_size))
    assert jnp.allclose(out_fast, ref_small, atol=2e-2, rtol=2e-2), \
        "fast-path mismatch vs reference"

    print("KERNEL_OK")
</pallas_src>

<mosaic_0001>
module attributes {stable_mosaic.version = 11 : i64} {
  func.func @kernel(%arg0: i32, %arg1: memref<16x16xf32, #tpu.memory_space<vmem>>, %arg2: memref<5x128x128xbf16, #tpu.memory_space<vmem>>, %arg3: memref<8x128xf32, #tpu.memory_space<vmem>>, %arg4: memref<16x128xbf16, #tpu.memory_space<vmem>>) attributes {dimension_semantics = [#tpu.dimension_semantics<parallel>], iteration_bounds = array<i64: 1>, scalar_prefetch = 0 : i64, scratch_operands = 0 : i64, tpu.core_type = #tpu.core_type<tc>, window_params = [{transform_indices = @transform_0, window_bounds = array<i64: 16, 16>}, {pipeline_mode = #tpu.pipeline_mode<synchronous>, transform_indices = @transform_1, window_bounds = array<i64: 5, 128, 128>}, {pipeline_mode = #tpu.pipeline_mode<synchronous>, transform_indices = @transform_2, window_bounds = array<i64: 8, 128>}, {transform_indices = @transform_3, window_bounds = array<i64: 16, 128>}]} {
    %c0 = arith.constant 0 : index
    %c0_0 = arith.constant 0 : index
    %0 = vector.load %arg1[%c0, %c0_0] : memref<16x16xf32, #tpu.memory_space<vmem>>, vector<16x16xf32>
    %1 = arith.truncf %0 : vector<16x16xf32> to vector<16x16xbf16>
    %c0_1 = arith.constant 0 : index
    %c0_2 = arith.constant 0 : index
    %c0_3 = arith.constant 0 : index
    %2 = vector.load %arg2[%c0_1, %c0_2, %c0_3] : memref<5x128x128xbf16, #tpu.memory_space<vmem>>, vector<1x16x128xbf16>
    %3 = vector.shape_cast %2 : vector<1x16x128xbf16> to vector<16x128xbf16>
    %cst = arith.constant dense<0.000000e+00> : vector<16x128xf32>
    %4 = tpu.matmul %1, %3, %cst {dimension_numbers = #tpu.dot_dimension_numbers<[1], [0], [0], [1], [0, 0, 1, 1], [], []>} : vector<16x16xbf16>, vector<16x128xbf16>, vector<16x128xf32> -> vector<16x128xf32>
    %c0_4 = arith.constant 0 : index
    %c0_5 = arith.constant 0 : index
    %5 = vector.load %arg3[%c0_4, %c0_5] : memref<8x128xf32, #tpu.memory_space<vmem>>, vector<1x128xf32>
    %6 = vector.broadcast %5 : vector<1x128xf32> to vector<16x128xf32>
    %7 = arith.addf %4, %6 : vector<16x128xf32>
    %cst_6 = arith.constant 0.000000e+00 : f32
    %8 = vector.broadcast %cst_6 : f32 to vector<16x128xf32>
    %9 = arith.maximumf %7, %8 : vector<16x128xf32>
    %10 = arith.truncf %9 : vector<16x128xf32> to vector<16x128xbf16>
    %c1 = arith.constant 1 : index
    %c0_7 = arith.constant 0 : index
    %c0_8 = arith.constant 0 : index
    %11 = vector.load %arg2[%c1, %c0_7, %c0_8] : memref<5x128x128xbf16, #tpu.memory_space<vmem>>, vector<1x128x128xbf16>
    %12 = vector.shape_cast %11 : vector<1x128x128xbf16> to vector<128x128xbf16>
    %cst_9 = arith.constant dense<0.000000e+00> : vector<16x128xf32>
    %13 = tpu.matmul %10, %12, %cst_9 {dimension_numbers = #tpu.dot_dimension_numbers<[1], [0], [0], [1], [0, 0, 1, 1], [], []>} : vector<16x128xbf16>, vector<128x128xbf16>, vector<16x128xf32> -> vector<16x128xf32>
    %c1_10 = arith.constant 1 : index
    %c0_11 = arith.constant 0 : index
    %14 = vector.load %arg3[%c1_10, %c0_11] : memref<8x128xf32, #tpu.memory_space<vmem>>, vector<1x128xf32>
    %15 = vector.broadcast %14 : vector<1x128xf32> to vector<16x128xf32>
    %16 = arith.addf %13, %15 : vector<16x128xf32>
    %cst_12 = arith.constant 0.000000e+00 : f32
    %17 = vector.broadcast %cst_12 : f32 to vector<16x128xf32>
    %18 = arith.maximumf %16, %17 : vector<16x128xf32>
    %19 = arith.truncf %18 : vector<16x128xf32> to vector<16x128xbf16>
    %c2 = arith.constant 2 : index
    %c0_13 = arith.constant 0 : index
    %c0_14 = arith.constant 0 : index
    %20 = vector.load %arg2[%c2, %c0_13, %c0_14] : memref<5x128x128xbf16, #tpu.memory_space<vmem>>, vector<1x128x128xbf16>
    %21 = vector.shape_cast %20 : vector<1x128x128xbf16> to vector<128x128xbf16>
    %cst_15 = arith.constant dense<0.000000e+00> : vector<16x128xf32>
    %22 = tpu.matmul %19, %21, %cst_15 {dimension_numbers = #tpu.dot_dimension_numbers<[1], [0], [0], [1], [0, 0, 1, 1], [], []>} : vector<16x128xbf16>, vector<128x128xbf16>, vector<16x128xf32> -> vector<16x128xf32>
    %c2_16 = arith.constant 2 : index
    %c0_17 = arith.constant 0 : index
    %23 = vector.load %arg3[%c2_16, %c0_17] : memref<8x128xf32, #tpu.memory_space<vmem>>, vector<1x128xf32>
    %24 = vector.broadcast %23 : vector<1x128xf32> to vector<16x128xf32>
    %25 = arith.addf %22, %24 : vector<16x128xf32>
    %cst_18 = arith.constant 0.000000e+00 : f32
    %26 = vector.broadcast %cst_18 : f32 to vector<16x128xf32>
    %27 = arith.maximumf %25, %26 : vector<16x128xf32>
    %28 = arith.truncf %27 : vector<16x128xf32> to vector<16x128xbf16>
    %c3 = arith.constant 3 : index
    %c0_19 = arith.constant 0 : index
    %c0_20 = arith.constant 0 : index
    %29 = vector.load %arg2[%c3, %c0_19, %c0_20] : memref<5x128x128xbf16, #tpu.memory_space<vmem>>, vector<1x128x128xbf16>
    %30 = vector.shape_cast %29 : vector<1x128x128xbf16> to vector<128x128xbf16>
    %cst_21 = arith.constant dense<0.000000e+00> : vector<16x128xf32>
    %31 = tpu.matmul %28, %30, %cst_21 {dimension_numbers = #tpu.dot_dimension_numbers<[1], [0], [0], [1], [0, 0, 1, 1], [], []>} : vector<16x128xbf16>, vector<128x128xbf16>, vector<16x128xf32> -> vector<16x128xf32>
    %c3_22 = arith.constant 3 : index
    %c0_23 = arith.constant 0 : index
    %32 = vector.load %arg3[%c3_22, %c0_23] : memref<8x128xf32, #tpu.memory_space<vmem>>, vector<1x128xf32>
    %33 = vector.broadcast %32 : vector<1x128xf32> to vector<16x128xf32>
    %34 = arith.addf %31, %33 : vector<16x128xf32>
    %cst_24 = arith.constant 0.000000e+00 : f32
    %35 = vector.broadcast %cst_24 : f32 to vector<16x128xf32>
    %36 = arith.maximumf %34, %35 : vector<16x128xf32>
    %37 = arith.truncf %36 : vector<16x128xf32> to vector<16x128xbf16>
    %c4 = arith.constant 4 : index
    %c0_25 = arith.constant 0 : index
    %c0_26 = arith.constant 0 : index
    %38 = vector.load %arg2[%c4, %c0_25, %c0_26] : memref<5x128x128xbf16, #tpu.memory_space<vmem>>, vector<1x128x128xbf16>
    %39 = vector.shape_cast %38 : vector<1x128x128xbf16> to vector<128x128xbf16>
    %cst_27 = arith.constant dense<0.000000e+00> : vector<16x128xf32>
    %40 = tpu.matmul %37, %39, %cst_27 {dimension_numbers = #tpu.dot_dimension_numbers<[1], [0], [0], [1], [0, 0, 1, 1], [], []>} : vector<16x128xbf16>, vector<128x128xbf16>, vector<16x128xf32> -> vector<16x128xf32>
    %c4_28 = arith.constant 4 : index
    %c0_29 = arith.constant 0 : index
    %41 = vector.load %arg3[%c4_28, %c0_29] : memref<8x128xf32, #tpu.memory_space<vmem>>, vector<1x128xf32>
    %42 = vector.broadcast %41 : vector<1x128xf32> to vector<16x128xf32>
    %43 = arith.addf %40, %42 : vector<16x128xf32>
    %44 = arith.truncf %43 : vector<16x128xf32> to vector<16x128xbf16>
    %c0_30 = arith.constant 0 : index
    %c0_31 = arith.constant 0 : index
    %45 = vector.load %arg4[%c0_30, %c0_31] : memref<16x128xbf16, #tpu.memory_space<vmem>>, vector<16x128xbf16>
    tpu.vector_store %arg4[%c0_30, %c0_31], %44 {strides = array<i32>} : memref<16x128xbf16, #tpu.memory_space<vmem>>, vector<16x128xbf16>,
    return
  }
  func.func @transform_0(%arg0: i32) -> (i32, i32) {
    %c0_i32 = arith.constant 0 : i32
    %c0_i32_0 = arith.constant 0 : i32
    return %arg0, %c0_i32 : i32, i32
  }
  func.func @transform_1(%arg0: i32) -> (i32, i32, i32) {
    %c0_i32 = arith.constant 0 : i32
    %c0_i32_0 = arith.constant 0 : i32
    %c0_i32_1 = arith.constant 0 : i32
    %c0_i32_2 = arith.constant 0 : i32
    return %c0_i32, %c0_i32_0, %c0_i32_1 : i32, i32, i32
  }
  func.func @transform_2(%arg0: i32) -> (i32, i32) {
    %c0_i32 = arith.constant 0 : i32
    %c0_i32_0 = arith.constant 0 : i32
    %c0_i32_1 = arith.constant 0 : i32
    return %c0_i32, %c0_i32_0 : i32, i32
  }
  func.func @transform_3(%arg0: i32) -> (i32, i32) {
    %c0_i32 = arith.constant 0 : i32
    %c0_i32_0 = arith.constant 0 : i32
    return %arg0, %c0_i32 : i32, i32
  }
}

</mosaic_0001>

<llo_original>
// kernel: qnetwork_forward.1
$region0: #{qnetwork_forward.1}
  #allocation0 [shape = 'u32[]', space=smem, size = 0x4, offset = 0x4, fixed_abs, tag = 'smem constant byte address 0x4 - core index']
  #allocation1 [shape = 'u32[144,128]{1,0:T(1,128)}', space=vmem, size = 0x12000, scoped, tag = 'internal scratch']
  %s0 = inlined_call_operand.vmem [shape: f32[16,16], index: 0, kind: input, shape index: {}]
  %s1 = inlined_call_operand.hbm [shape: bf16[5,128,128], index: 1, kind: input, shape index: {}]
  %s2 = inlined_call_operand.vmem [shape: f32[8,128], index: 2, kind: input, shape index: {}]
  %s3 = inlined_call_operand.vmem [shape: bf16[16,128], index: 3, kind: output, shape index: {}]
  %s4 = sld [smem:[#allocation0]]
  $region26: #{qnetwork_forward.1} parent=0
    _
  %s6 = ssub.s32 1, %s4
  %s7 = scalar_select 0, %s6, %s4
  $region1: #{qnetwork_forward.1} parent=0
    #allocation2 [shape = 'u8[163840]{0}', space=vmem, size = 0x28000, scoped, tag = 'input window, operand 1, single buffered']
    #allocation3 [shape = 's32[1]{0}', space=sflag, size = 0x4, scoped, tag = 'scoped memory for qnetwork_forward.1']
    %8 = vsyncpa [#allocation3], 0
    // Predicated region
    $region2: #{qnetwork_forward.1} parent=1 // pred_check
      _
    $region3: #{qnetwork_forward.1} parent=1 // pred_check_branch
      %10 = sbr.rel (0) target = $region5
    $region4: #{qnetwork_forward.1} parent=1 // pred_region
      _
    $region5: #{qnetwork_forward.1} parent=1 // pred_fallthru
      _
    // Predicated region
    $region6: #{qnetwork_forward.1} parent=1 // pred_check
      _
    $region7: #{qnetwork_forward.1} parent=1 // pred_check_branch
      %12 = sbr.rel (0) target = $region9
    $region8: #{qnetwork_forward.1} parent=1 // pred_region
      %s14 = ssub.s32 5120, 5120
      %15 = vsyncadd [#allocation3], %s14
      %s16 = sshll.u32 [#allocation2], 4
      %s17 = int_to_ptr.vmem [resolvable:$true] %s16
      %22 = dma.hbm_to_vmem [thread:$0]  %s1, 5120, %s17, [#allocation3], 64, 64, 4
    $region9: #{qnetwork_forward.1} parent=1 // pred_fallthru
      _
    // Predicated region
    $region10: #{qnetwork_forward.1} parent=1 // pred_check
      _
    $region11: #{qnetwork_forward.1} parent=1 // pred_check_branch
      %24 = sbr.rel (0) target = $region13
    $region12: #{qnetwork_forward.1} parent=1 // pred_region
      _
    $region13: #{qnetwork_forward.1} parent=1 // pred_fallthru
      _
    // Predicated region
    $region14: #{qnetwork_forward.1} parent=1 // pred_check
      _
    $region15: #{qnetwork_forward.1} parent=1 // pred_check_branch
      %26 = sbr.rel (0) target = $region17
    $region16: #{qnetwork_forward.1} parent=1 // pred_region
      %27 = dma.done [#allocation3], 5120
    $region17: #{qnetwork_forward.1} parent=1 // pred_fallthru
      _
    %v29 = vld [vmem:[%s0] sm:$0xff]
    %v30 = vld [vmem:[%s0 + $0x8] sm:$0xff]
    %v31 = vpack.c.bf16 %v30, %v29
    %v32 = vld [vmem:[#allocation2] sm:$0xf]
    %v33 = vld [vmem:[#allocation2 + $0x4] sm:$0xf]
    %v34 = vld [vmem:[%s2] sm:$0x1]
    %v35 = vlaneseq
    %v36 = vshrl.u32 %v35, 7
    %v37 = vsub.s32 0, %v36
    %v38 = vrot.slane %v34, %v37
    %v41 = vunpack.c.l.b16 %v32
    %v42 = vunpack.c.l.b16 %v33
    %v43 = vpack.c.b16 %v42, %v41
    %vm45 = vcmask 130048
    %v47 = vsel %vm45, %v31, 0
    %49 = vmatprep.subr.bf16.mxu0 0
    %50 = vmatpush1.bf16.msra.mxu0 %v43
    %51 = vmatprep.subr.bf16.mxu0 0
    %52 = vmatpush1.bf16.msra.mxu0 0
    %53 = vmatprep.subr.bf16.mxu0 0
    %54 = vmatpush1.bf16.msra.mxu0 0
    %55 = vmatprep.subr.bf16.mxu0 0
    %56 = vmatpush1.bf16.msra.mxu0 0
    %57 = vmatprep.subr.bf16.mxu0 0
    %58 = vmatpush1.bf16.msra.mxu0 0
    %59 = vmatprep.subr.bf16.mxu0 0
    %60 = vmatpush1.bf16.msra.mxu0 0
    %61 = vmatprep.subr.bf16.mxu0 0
    %62 = vmatpush1.bf16.msra.mxu0 0
    %63 = vmatprep.subr.bf16.mxu0 0
    %64 = vmatpush1.bf16.msra.mxu0 0
    %65 = vmatprep.subr.bf16.mxu0 0
    %66 = vmatpush1.bf16.msra.mxu0 0
    %67 = vmatprep.subr.bf16.mxu0 0
    %68 = vmatpush1.bf16.msra.mxu0 0
    %69 = vmatprep.subr.bf16.mxu0 0
    %70 = vmatpush1.bf16.msra.mxu0 0
    %71 = vmatprep.subr.bf16.mxu0 0
    %72 = vmatpush1.bf16.msra.mxu0 0
    %73 = vmatprep.subr.bf16.mxu0 0
    %74 = vmatpush1.bf16.msra.mxu0 0
    %75 = vmatprep.subr.bf16.mxu0 0
    %76 = vmatpush1.bf16.msra.mxu0 0
    %77 = vmatprep.subr.bf16.mxu0 0
    %78 = vmatpush1.bf16.msra.mxu0 0
    %79 = vmatprep.subr.bf16.mxu0 0
    %80 = vmatpush1.bf16.msra.mxu0 0
    %81 = vmatprep.mubr.bf16.mxu0 0
    %82 = vmatmul.mubr.bf16.gmra.mrb[0].mxu0 %v47
    %v83 = vpop.f32.mrb[0].mxu0
    %v84 = vadd.f32 %v38, %v83
    %v85 = vpop.f32.mrb[0].mxu0
    %v86 = vpop.f32.mrb[0].mxu0
    %v87 = vadd.f32 %v38, %v86
    %v88 = vpop.f32.mrb[0].mxu0
    %89 = vdwg.mxu0
    %v90 = vmax.f32 %v84, 0.0
    %v91 = vmax.f32 %v87, 0.0
    %v92 = vpack.c.bf16 %v91, %v90
    %s93 = scalar_lea.vmem [#allocation2], 64
    %v94 = vld [vmem:[%s93] sm:$0xf]
    %v95 = vld [vmem:[%s93 + $0x4] sm:$0xf]
    %v96 = vld [vmem:[%s93 + $0x8] sm:$0xf]
    %v97 = vld [vmem:[%s93 + $0xc] sm:$0xf]
    %v98 = vld [vmem:[%s93 + $0x10] sm:$0xf]
    %v99 = vld [vmem:[%s93 + $0x14] sm:$0xf]
    %v100 = vld [vmem:[%s93 + $0x18] sm:$0xf]
    %v101 = vld [vmem:[%s93 + $0x1c] sm:$0xf]
    %v102 = vld [vmem:[%s93 + $0x20] sm:$0xf]
    %v103 = vld [vmem:[%s93 + $0x24] sm:$0xf]
    %v104 = vld [vmem:[%s93 + $0x28] sm:$0xf]
    %v105 = vld [vmem:[%s93 + $0x2c] sm:$0xf]
    %v106 = vld [vmem:[%s93 + $0x30] sm:$0xf]
    %v107 = vld [vmem:[%s93 + $0x34] sm:$0xf]
    %v108 = vld [vmem:[%s93 + $0x38] sm:$0xf]
    %v109 = vld [vmem:[%s93 + $0x3c] sm:$0xf]
    %v110 = vld [vmem:[%s2 + $0x1] sm:$0x1]
    %v111 = vlaneseq
    %v112 = vshrl.u32 %v111, 7
    %v113 = vsub.s32 0, %v112
    %v114 = vrot.slane %v110, %v113
    %v131 = vunpack.c.l.b16 %v94
    %v132 = vunpack.c.l.b16 %v95
    %v133 = vunpack.c.l.b16 %v96
    %v134 = vunpack.c.l.b16 %v97
    %v135 = vunpack.c.l.b16 %v98
    %v136 = vunpack.c.l.b16 %v99
    %v137 = vunpack.c.l.b16 %v100
    %v138 = vunpack.c.l.b16 %v101
    %v139 = vunpack.c.l.b16 %v102
    %v140 = vunpack.c.l.b16 %v103
    %v141 = vunpack.c.l.b16 %v104
    %v142 = vunpack.c.l.b16 %v105
    %v143 = vunpack.c.l.b16 %v106
    %v144 = vunpack.c.l.b16 %v107
    %v145 = vunpack.c.l.b16 %v108
    %v146 = vunpack.c.l.b16 %v109
    %v147 = vpack.c.b16 %v132, %v131
    %v148 = vpack.c.b16 %v134, %v133
    %v149 = vpack.c.b16 %v136, %v135
    %v150 = vpack.c.b16 %v138, %v137
    %v151 = vpack.c.b16 %v140, %v139
    %v152 = vpack.c.b16 %v142, %v141
    %v153 = vpack.c.b16 %v144, %v143
    %v154 = vpack.c.b16 %v146, %v145
    %163 = vmatprep.subr.bf16.mxu0 0
    %164 = vmatpush1.bf16.msra.mxu0 %v147
    %165 = vmatprep.subr.bf16.mxu0 0
    %166 = vmatpush1.bf16.msra.mxu0 %v148
    %167 = vmatprep.subr.bf16.mxu0 0
    %168 = vmatpush1.bf16.msra.mxu0 %v149
    %169 = vmatprep.subr.bf16.mxu0 0
    %170 = vmatpush1.bf16.msra.mxu0 %v150
    %171 = vmatprep.subr.bf16.mxu0 0
    %172 = vmatpush1.bf16.msra.mxu0 %v151
    %173 = vmatprep.subr.bf16.mxu0 0
    %174 = vmatpush1.bf16.msra.mxu0 %v152
    %175 = vmatprep.subr.bf16.mxu0 0
    %176 = vmatpush1.bf16.msra.mxu0 %v153
    %177 = vmatprep.subr.bf16.mxu0 0
    %178 = vmatpush1.bf16.msra.mxu0 %v154
    %179 = vmatprep.subr.bf16.mxu0 0
    %180 = vmatpush1.bf16.msra.mxu0 0
    %181 = vmatprep.subr.bf16.mxu0 0
    %182 = vmatpush1.bf16.msra.mxu0 0
    %183 = vmatprep.subr.bf16.mxu0 0
    %184 = vmatpush1.bf16.msra.mxu0 0
    %185 = vmatprep.subr.bf16.mxu0 0
    %186 = vmatpush1.bf16.msra.mxu0 0
    %187 = vmatprep.subr.bf16.mxu0 0
    %188 = vmatpush1.bf16.msra.mxu0 0
    %189 = vmatprep.subr.bf16.mxu0 0
    %190 = vmatpush1.bf16.msra.mxu0 0
    %191 = vmatprep.subr.bf16.mxu0 0
    %192 = vmatpush1.bf16.msra.mxu0 0
    %193 = vmatprep.subr.bf16.mxu0 0
    %194 = vmatpush1.bf16.msra.mxu0 0
    %195 = vmatprep.mubr.bf16.mxu0 0
    %196 = vmatmul.mubr.bf16.gmra.mrb[0].mxu0 %v92
    %v197 = vpop.f32.mrb[0].mxu0
    %v198 = vadd.f32 %v114, %v197
    %v199 = vpop.f32.mrb[0].mxu0
    %v200 = vpop.f32.mrb[0].mxu0
    %v201 = vadd.f32 %v114, %v200
    %v202 = vpop.f32.mrb[0].mxu0
    %203 = vdwg.mxu0
    %v204 = vmax.f32 %v198, 0.0
    %v205 = vmax.f32 %v201, 0.0
    %v206 = vpack.c.bf16 %v205, %v204
    %s207 = scalar_lea.vmem [#allocation2], 128
    %v208 = vld [vmem:[%s207] sm:$0xf]
    %v209 = vld [vmem:[%s207 + $0x4] sm:$0xf]
    %v210 = vld [vmem:[%s207 + $0x8] sm:$0xf]
    %v211 = vld [vmem:[%s207 + $0xc] sm:$0xf]
    %v212 = vld [vmem:[%s207 + $0x10] sm:$0xf]
    %v213 = vld [vmem:[%s207 + $0x14] sm:$0xf]
    %v214 = vld [vmem:[%s207 + $0x18] sm:$0xf]
    %v215 = vld [vmem:[%s207 + $0x1c] sm:$0xf]
    %v216 = vld [vmem:[%s207 + $0x20] sm:$0xf]
    %v217 = vld [vmem:[%s207 + $0x24] sm:$0xf]
    %v218 = vld [vmem:[%s207 + $0x28] sm:$0xf]
    %v219 = vld [vmem:[%s207 + $0x2c] sm:$0xf]
    %v220 = vld [vmem:[%s207 + $0x30] sm:$0xf]
    %v221 = vld [vmem:[%s207 + $0x34] sm:$0xf]
    %v222 = vld [vmem:[%s207 + $0x38] sm:$0xf]
    %v223 = vld [vmem:[%s207 + $0x3c] sm:$0xf]
    %v224 = vld [vmem:[%s2 + $0x2] sm:$0x1]
    %v225 = vlaneseq
    %v226 = vshrl.u32 %v225, 7
    %v227 = vsub.s32 0, %v226
    %v228 = vrot.slane %v224, %v227
    %v245 = vunpack.c.l.b16 %v208
    %v246 = vunpack.c.l.b16 %v209
    %v247 = vunpack.c.l.b16 %v210
    %v248 = vunpack.c.l.b16 %v211
    %v249 = vunpack.c.l.b16 %v212
    %v250 = vunpack.c.l.b16 %v213
    %v251 = vunpack.c.l.b16 %v214
    %v252 = vunpack.c.l.b16 %v215
    %v253 = vunpack.c.l.b16 %v216
    %v254 = vunpack.c.l.b16 %v217
    %v255 = vunpack.c.l.b16 %v218
    %v256 = vunpack.c.l.b16 %v219
    %v257 = vunpack.c.l.b16 %v220
    %v258 = vunpack.c.l.b16 %v221
    %v259 = vunpack.c.l.b16 %v222
    %v260 = vunpack.c.l.b16 %v223
    %v261 = vpack.c.b16 %v246, %v245
    %v262 = vpack.c.b16 %v248, %v247
    %v263 = vpack.c.b16 %v250, %v249
    %v264 = vpack.c.b16 %v252, %v251
    %v265 = vpack.c.b16 %v254, %v253
    %v266 = vpack.c.b16 %v256, %v255
    %v267 = vpack.c.b16 %v258, %v257
    %v268 = vpack.c.b16 %v260, %v259
    %277 = vmatprep.subr.bf16.mxu0 0
    %278 = vmatpush1.bf16.msra.mxu0 %v261
    %279 = vmatprep.subr.bf16.mxu0 0
    %280 = vmatpush1.bf16.msra.mxu0 %v262
    %281 = vmatprep.subr.bf16.mxu0 0
    %282 = vmatpush1.bf16.msra.mxu0 %v263
    %283 = vmatprep.subr.bf16.mxu0 0
    %284 = vmatpush1.bf16.msra.mxu0 %v264
    %285 = vmatprep.subr.bf16.mxu0 0
    %286 = vmatpush1.bf16.msra.mxu0 %v265
    %287 = vmatprep.subr.bf16.mxu0 0
    %288 = vmatpush1.bf16.msra.mxu0 %v266
    %289 = vmatprep.subr.bf16.mxu0 0
    %290 = vmatpush1.bf16.msra.mxu0 %v267
    %291 = vmatprep.subr.bf16.mxu0 0
    %292 = vmatpush1.bf16.msra.mxu0 %v268
    %293 = vmatprep.subr.bf16.mxu0 0
    %294 = vmatpush1.bf16.msra.mxu0 0
    %295 = vmatprep.subr.bf16.mxu0 0
    %296 = vmatpush1.bf16.msra.mxu0 0
    %297 = vmatprep.subr.bf16.mxu0 0
    %298 = vmatpush1.bf16.msra.mxu0 0
    %299 = vmatprep.subr.bf16.mxu0 0
    %300 = vmatpush1.bf16.msra.mxu0 0
    %301 = vmatprep.subr.bf16.mxu0 0
    %302 = vmatpush1.bf16.msra.mxu0 0
    %303 = vmatprep.subr.bf16.mxu0 0
    %304 = vmatpush1.bf16.msra.mxu0 0
    %305 = vmatprep.subr.bf16.mxu0 0
    %306 = vmatpush1.bf16.msra.mxu0 0
    %307 = vmatprep.subr.bf16.mxu0 0
    %308 = vmatpush1.bf16.msra.mxu0 0
    %309 = vmatprep.mubr.bf16.mxu0 0
    %310 = vmatmul.mubr.bf16.gmra.mrb[0].mxu0 %v206
    %v311 = vpop.f32.mrb[0].mxu0
    %v312 = vadd.f32 %v228, %v311
    %v313 = vpop.f32.mrb[0].mxu0
    %v314 = vpop.f32.mrb[0].mxu0
    %v315 = vadd.f32 %v228, %v314
    %v316 = vpop.f32.mrb[0].mxu0
    %317 = vdwg.mxu0
    %v318 = vmax.f32 %v312, 0.0
    %v319 = vmax.f32 %v315, 0.0
    %v320 = vpack.c.bf16 %v319, %v318
    %s321 = scalar_lea.vmem [#allocation2], 192
    %v322 = vld [vmem:[%s321] sm:$0xf]
    %v323 = vld [vmem:[%s321 + $0x4] sm:$0xf]
    %v324 = vld [vmem:[%s321 + $0x8] sm:$0xf]
    %v325 = vld [vmem:[%s321 + $0xc] sm:$0xf]
    %v326 = vld [vmem:[%s321 + $0x10] sm:$0xf]
    %v327 = vld [vmem:[%s321 + $0x14] sm:$0xf]
    %v328 = vld [vmem:[%s321 + $0x18] sm:$0xf]
    %v329 = vld [vmem:[%s321 + $0x1c] sm:$0xf]
    %v330 = vld [vmem:[%s321 + $0x20] sm:$0xf]
    %v331 = vld [vmem:[%s321 + $0x24] sm:$0xf]
    %v332 = vld [vmem:[%s321 + $0x28] sm:$0xf]
    %v333 = vld [vmem:[%s321 + $0x2c] sm:$0xf]
    %v334 = vld [vmem:[%s321 + $0x30] sm:$0xf]
    %v335 = vld [vmem:[%s321 + $0x34] sm:$0xf]
    %v336 = vld [vmem:[%s321 + $0x38] sm:$0xf]
    %v337 = vld [vmem:[%s321 + $0x3c] sm:$0xf]
    %v338 = vld [vmem:[%s2 + $0x3] sm:$0x1]
    %v339 = vlaneseq
    %v340 = vshrl.u32 %v339, 7
    %v341 = vsub.s32 0, %v340
    %v342 = vrot.slane %v338, %v341
    %v359 = vunpack.c.l.b16 %v322
    %v360 = vunpack.c.l.b16 %v323
    %v361 = vunpack.c.l.b16 %v324
    %v362 = vunpack.c.l.b16 %v325
    %v363 = vunpack.c.l.b16 %v326
    %v364 = vunpack.c.l.b16 %v327
    %v365 = vunpack.c.l.b16 %v328
    %v366 = vunpack.c.l.b16 %v329
    %v367 = vunpack.c.l.b16 %v330
    %v368 = vunpack.c.l.b16 %v331
    %v369 = vunpack.c.l.b16 %v332
    %v370 = vunpack.c.l.b16 %v333
    %v371 = vunpack.c.l.b16 %v334
    %v372 = vunpack.c.l.b16 %v335
    %v373 = vunpack.c.l.b16 %v336
    %v374 = vunpack.c.l.b16 %v337
    %v375 = vpack.c.b16 %v360, %v359
    %v376 = vpack.c.b16 %v362, %v361
    %v377 = vpack.c.b16 %v364, %v363
    %v378 = vpack.c.b16 %v366, %v365
    %v379 = vpack.c.b16 %v368, %v367
    %v380 = vpack.c.b16 %v370, %v369
    %v381 = vpack.c.b16 %v372, %v371
    %v382 = vpack.c.b16 %v374, %v373
    %391 = vmatprep.subr.bf16.mxu0 0
    %392 = vmatpush1.bf16.msra.mxu0 %v375
    %393 = vmatprep.subr.bf16.mxu0 0
    %394 = vmatpush1.bf16.msra.mxu0 %v376
    %395 = vmatprep.subr.bf16.mxu0 0
    %396 = vmatpush1.bf16.msra.mxu0 %v377
    %397 = vmatprep.subr.bf16.mxu0 0
    %398 = vmatpush1.bf16.msra.mxu0 %v378
    %399 = vmatprep.subr.bf16.mxu0 0
    %400 = vmatpush1.bf16.msra.mxu0 %v379
    %401 = vmatprep.subr.bf16.mxu0 0
    %402 = vmatpush1.bf16.msra.mxu0 %v380
    %403 = vmatprep.subr.bf16.mxu0 0
    %404 = vmatpush1.bf16.msra.mxu0 %v381
    %405 = vmatprep.subr.bf16.mxu0 0
    %406 = vmatpush1.bf16.msra.mxu0 %v382
    %407 = vmatprep.subr.bf16.mxu0 0
    %408 = vmatpush1.bf16.msra.mxu0 0
    %409 = vmatprep.subr.bf16.mxu0 0
    %410 = vmatpush1.bf16.msra.mxu0 0
    %411 = vmatprep.subr.bf16.mxu0 0
    %412 = vmatpush1.bf16.msra.mxu0 0
    %413 = vmatprep.subr.bf16.mxu0 0
    %414 = vmatpush1.bf16.msra.mxu0 0
    %415 = vmatprep.subr.bf16.mxu0 0
    %416 = vmatpush1.bf16.msra.mxu0 0
    %417 = vmatprep.subr.bf16.mxu0 0
    %418 = vmatpush1.bf16.msra.mxu0 0
    %419 = vmatprep.subr.bf16.mxu0 0
    %420 = vmatpush1.bf16.msra.mxu0 0
    %421 = vmatprep.subr.bf16.mxu0 0
    %422 = vmatpush1.bf16.msra.mxu0 0
    %423 = vmatprep.mubr.bf16.mxu0 0
    %424 = vmatmul.mubr.bf16.gmra.mrb[0].mxu0 %v320
    %v425 = vpop.f32.mrb[0].mxu0
    %v426 = vadd.f32 %v342, %v425
    %v427 = vpop.f32.mrb[0].mxu0
    %v428 = vpop.f32.mrb[0].mxu0
    %v429 = vadd.f32 %v342, %v428
    %v430 = vpop.f32.mrb[0].mxu0
    %431 = vdwg.mxu0
    %v432 = vmax.f32 %v426, 0.0
    %v433 = vmax.f32 %v429, 0.0
    %v434 = vpack.c.bf16 %v433, %v432
    %s435 = scalar_lea.vmem [#allocation2], 256
    %v436 = vld [vmem:[%s435] sm:$0xf]
    %v437 = vld [vmem:[%s435 + $0x4] sm:$0xf]
    %v438 = vld [vmem:[%s435 + $0x8] sm:$0xf]
    %v439 = vld [vmem:[%s435 + $0xc] sm:$0xf]
    %v440 = vld [vmem:[%s435 + $0x10] sm:$0xf]
    %v441 = vld [vmem:[%s435 + $0x14] sm:$0xf]
    %v442 = vld [vmem:[%s435 + $0x18] sm:$0xf]
    %v443 = vld [vmem:[%s435 + $0x1c] sm:$0xf]
    %v444 = vld [vmem:[%s435 + $0x20] sm:$0xf]
    %v445 = vld [vmem:[%s435 + $0x24] sm:$0xf]
    %v446 = vld [vmem:[%s435 + $0x28] sm:$0xf]
    %v447 = vld [vmem:[%s435 + $0x2c] sm:$0xf]
    %v448 = vld [vmem:[%s435 + $0x30] sm:$0xf]
    %v449 = vld [vmem:[%s435 + $0x34] sm:$0xf]
    %v450 = vld [vmem:[%s435 + $0x38] sm:$0xf]
    %v451 = vld [vmem:[%s435 + $0x3c] sm:$0xf]
    %v452 = vld [vmem:[%s2 + $0x4] sm:$0x1]
    %v453 = vlaneseq
    %v454 = vshrl.u32 %v453, 7
    %v455 = vsub.s32 0, %v454
    %v456 = vrot.slane %v452, %v455
    %v473 = vunpack.c.l.b16 %v436
    %v474 = vunpack.c.l.b16 %v437
    %v475 = vunpack.c.l.b16 %v438
    %v476 = vunpack.c.l.b16 %v439
    %v477 = vunpack.c.l.b16 %v440
    %v478 = vunpack.c.l.b16 %v441
    %v479 = vunpack.c.l.b16 %v442
    %v480 = vunpack.c.l.b16 %v443
    %v481 = vunpack.c.l.b16 %v444
    %v482 = vunpack.c.l.b16 %v445
    %v483 = vunpack.c.l.b16 %v446
    %v484 = vunpack.c.l.b16 %v447
    %v485 = vunpack.c.l.b16 %v448
    %v486 = vunpack.c.l.b16 %v449
    %v487 = vunpack.c.l.b16 %v450
    %v488 = vunpack.c.l.b16 %v451
    %v489 = vpack.c.b16 %v474, %v473
    %v490 = vpack.c.b16 %v476, %v475
    %v491 = vpack.c.b16 %v478, %v477
    %v492 = vpack.c.b16 %v480, %v479
    %v493 = vpack.c.b16 %v482, %v481
    %v494 = vpack.c.b16 %v484, %v483
    %v495 = vpack.c.b16 %v486, %v485
    %v496 = vpack.c.b16 %v488, %v487
    %505 = vmatprep.subr.bf16.mxu0 0
    %506 = vmatpush1.bf16.msra.mxu0 %v489
    %507 = vmatprep.subr.bf16.mxu0 0
    %508 = vmatpush1.bf16.msra.mxu0 %v490
    %509 = vmatprep.subr.bf16.mxu0 0
    %510 = vmatpush1.bf16.msra.mxu0 %v491
    %511 = vmatprep.subr.bf16.mxu0 0
    %512 = vmatpush1.bf16.msra.mxu0 %v492
    %513 = vmatprep.subr.bf16.mxu0 0
    %514 = vmatpush1.bf16.msra.mxu0 %v493
    %515 = vmatprep.subr.bf16.mxu0 0
    %516 = vmatpush1.bf16.msra.mxu0 %v494
    %517 = vmatprep.subr.bf16.mxu0 0
    %518 = vmatpush1.bf16.msra.mxu0 %v495
    %519 = vmatprep.subr.bf16.mxu0 0
    %520 = vmatpush1.bf16.msra.mxu0 %v496
    %521 = vmatprep.subr.bf16.mxu0 0
    %522 = vmatpush1.bf16.msra.mxu0 0
    %523 = vmatprep.subr.bf16.mxu0 0
    %524 = vmatpush1.bf16.msra.mxu0 0
    %525 = vmatprep.subr.bf16.mxu0 0
    %526 = vmatpush1.bf16.msra.mxu0 0
    %527 = vmatprep.subr.bf16.mxu0 0
    %528 = vmatpush1.bf16.msra.mxu0 0
    %529 = vmatprep.subr.bf16.mxu0 0
    %530 = vmatpush1.bf16.msra.mxu0 0
    %531 = vmatprep.subr.bf16.mxu0 0
    %532 = vmatpush1.bf16.msra.mxu0 0
    %533 = vmatprep.subr.bf16.mxu0 0
    %534 = vmatpush1.bf16.msra.mxu0 0
    %535 = vmatprep.subr.bf16.mxu0 0
    %536 = vmatpush1.bf16.msra.mxu0 0
    %537 = vmatprep.mubr.bf16.mxu0 0
    %538 = vmatmul.mubr.bf16.gmra.mrb[0].mxu0 %v434
    %v539 = vpop.f32.mrb[0].mxu0
    %v540 = vadd.f32 %v456, %v539
    %v541 = vpop.f32.mrb[0].mxu0
    %v542 = vpop.f32.mrb[0].mxu0
    %v543 = vadd.f32 %v456, %v542
    %v544 = vpop.f32.mrb[0].mxu0
    %545 = vdwg.mxu0
    %v546 = vpack.c.bf16 %v543, %v540
    %v548 = vunpack.c.l.b16 %v546
    %v549 = vunpack.c.h.b16 %v546
    %v550 = vpack.c.b16 %v548, %v548
    %v551 = vpack.c.b16 %v549, %v549
    %554 = vst [vmem:[%s3] sm:$0xf] %v550
    %555 = vst [vmem:[%s3 + $0x4] sm:$0xf] %v551
    // Predicated region
    $region18: #{qnetwork_forward.1} parent=1 // pred_check
      _
    $region19: #{qnetwork_forward.1} parent=1 // pred_check_branch
      %557 = sbr.rel (0) target = $region21
    $region20: #{qnetwork_forward.1} parent=1 // pred_region
      _
    $region21: #{qnetwork_forward.1} parent=1 // pred_fallthru
      _
    // Predicated region
    $region22: #{qnetwork_forward.1} parent=1 // pred_check
      _
    $region23: #{qnetwork_forward.1} parent=1 // pred_check_branch
      %559 = sbr.rel (0) target = $region25
    $region24: #{qnetwork_forward.1} parent=1 // pred_region
      _
    $region25: #{qnetwork_forward.1} parent=1 // pred_fallthru
      _
    %560 = vsyncpa [#allocation3], 1

</llo_original>
